<compile_context>
chip_gen: v6e
topology: v6e:2x2x1
jax: 0.10.0
libtpu: 0.0.40
codegen_flags: <defaults>
</compile_context>

<pallas_src>
import functools

import jax
import jax.numpy as jnp
from jax.experimental import pallas as pl
from jax.experimental.pallas import tpu as pltpu

IN_F = 11
HID = 100
OUT_F = 7
LANE = 128          # padded feature width (lane-dense)
TILE_B = 512        # batch rows per grid step (sized well under v7x 64 MiB VMEM)


def _round_up(n, m):
    return ((n + m - 1) // m) * m


def _pad_to(a, shape):
    pads = [(0, s - d) for d, s in zip(a.shape, shape)]
    return jnp.pad(a, pads)


def mlp_kernel(x_ref, w0_ref, b0_ref, w1_ref, b1_ref, w2_ref, b2_ref, o_ref):
    # Layer 0: (TB, 11) bf16 @ (11, 128) bf16 -> f32 acc, +bias, ReLU
    a = jnp.dot(x_ref[...], w0_ref[...], preferred_element_type=jnp.float32)
    a = jnp.maximum(a + b0_ref[...], 0.0)
    # Layer 1: (TB, 128) @ (128, 128) -> f32 acc, +bias, ReLU
    b = jnp.dot(a.astype(jnp.bfloat16), w1_ref[...],
                preferred_element_type=jnp.float32)
    b = jnp.maximum(b + b1_ref[...], 0.0)
    # Layer 2: (TB, 128) @ (128, 128) -> f32 acc, +bias  (cols >= 7 are junk/zero,
    # sliced away in the wrapper; store stays unmasked / lane-dense).
    c = jnp.dot(b.astype(jnp.bfloat16), w2_ref[...],
                preferred_element_type=jnp.float32)
    o_ref[...] = (c + b2_ref[...]).astype(o_ref.dtype)


@functools.partial(jax.jit, static_argnames=("tile_b",))
def net_forward(x, params, tile_b=TILE_B):
    """x: (B, 11) float32.  params: dict of (in, out)-layout f32 weights/biases."""
    B = x.shape[0]

    # Pad + cast parameters (zero-padding keeps the math identical; the padded
    # activation lanes are exactly relu(0 + 0) = 0 through the stack).
    w0 = _pad_to(params["w0"], (IN_F, LANE)).astype(jnp.bfloat16)
    w1 = _pad_to(params["w1"], (LANE, LANE)).astype(jnp.bfloat16)
    w2 = _pad_to(params["w2"], (LANE, LANE)).astype(jnp.bfloat16)
    b0 = _pad_to(params["b0"], (1, LANE))            # biases stay f32
    b1 = _pad_to(params["b1"], (1, LANE))
    b2 = _pad_to(params["b2"], (1, LANE))

    # Pick a batch tile and pad B so the grid divides evenly.
    tb = min(tile_b, _round_up(B, 16))
    Bp = _round_up(B, tb)
    x_p = _pad_to(x, (Bp, IN_F)).astype(jnp.bfloat16)

    grid = (Bp // tb,)
    const2d = lambda i: (0, 0)   # weights/biases: resident across grid steps

    flops = 2 * B * (IN_F * HID + HID * HID + HID * OUT_F)
    bytes_accessed = (
        B * IN_F * 2 + B * LANE * 4
        + (IN_F * LANE + 2 * LANE * LANE) * 2 + 3 * LANE * 4
    )

    out = pl.pallas_call(
        mlp_kernel,
        out_shape=jax.ShapeDtypeStruct((Bp, LANE), jnp.float32),
        grid_spec=pltpu.PrefetchScalarGridSpec(
            num_scalar_prefetch=0,
            grid=grid,
            in_specs=[
                pl.BlockSpec((tb, IN_F), lambda i: (i, 0)),      # x tile
                pl.BlockSpec((IN_F, LANE), const2d),             # w0
                pl.BlockSpec((1, LANE), const2d),                # b0
                pl.BlockSpec((LANE, LANE), const2d),             # w1
                pl.BlockSpec((1, LANE), const2d),                # b1
                pl.BlockSpec((LANE, LANE), const2d),             # w2
                pl.BlockSpec((1, LANE), const2d),                # b2
            ],
            out_specs=pl.BlockSpec((tb, LANE), lambda i: (i, 0)),
        ),
        compiler_params=pltpu.CompilerParams(
            dimension_semantics=("parallel",),
            vmem_limit_bytes=32 * 1024 * 1024,
        ),
        cost_estimate=pl.CostEstimate(
            flops=flops, transcendentals=0, bytes_accessed=bytes_accessed),
    )(x_p, w0, b0, w1, b1, w2, b2)

    return out[:B, :OUT_F]


def init_params(key):
    """Deterministic init mirroring nn.Linear default (uniform +-1/sqrt(fan_in))."""
    ks = jax.random.split(key, 6)

    def linear(kw, kb, fan_in, fan_out):
        bound = 1.0 / jnp.sqrt(fan_in)
        w = jax.random.uniform(kw, (fan_in, fan_out), jnp.float32, -bound, bound)
        b = jax.random.uniform(kb, (1, fan_out), jnp.float32, -bound, bound)
        return w, b

    w0, b0 = linear(ks[0], ks[1], IN_F, HID)
    w1, b1 = linear(ks[2], ks[3], HID, HID)
    w2, b2 = linear(ks[4], ks[5], HID, OUT_F)
    return {"w0": w0, "b0": b0, "w1": w1, "b1": b1, "w2": w2, "b2": b2}


def reference_forward_f32(x, p):
    a = jnp.maximum(x @ p["w0"] + p["b0"], 0.0)
    b = jnp.maximum(a @ p["w1"] + p["b1"], 0.0)
    return b @ p["w2"] + p["b2"]


def reference_forward_bf16(x, p):
    """Reference matching the kernel's bf16-input / f32-accumulate arithmetic."""
    bf = jnp.bfloat16
    a = jnp.dot(x.astype(bf), p["w0"].astype(bf),
                preferred_element_type=jnp.float32) + p["b0"]
    a = jnp.maximum(a, 0.0)
    b = jnp.dot(a.astype(bf), p["w1"].astype(bf),
                preferred_element_type=jnp.float32) + p["b1"]
    b = jnp.maximum(b, 0.0)
    return jnp.dot(b.astype(bf), p["w2"].astype(bf),
                   preferred_element_type=jnp.float32) + p["b2"]


if __name__ == "__main__":
    key = jax.random.PRNGKey(0)
    k_params, k_x = jax.random.split(key)
    params = init_params(k_params)

    batch = 32
    x = jax.random.normal(k_x, (batch, IN_F), dtype=jnp.float32)

    out = net_forward(x, params)
    out = jax.block_until_ready(out)
    assert out.shape == (batch, OUT_F), out.shape

    # Check against a reference using the same bf16-input / f32-acc arithmetic.
    ref_bf16 = reference_forward_bf16(x, params)
    assert jnp.allclose(out, ref_bf16, atol=2e-3, rtol=2e-3)

    # Sanity-check against the full-f32 PyTorch-equivalent forward (looser tol
    # accounts for the bf16 operand cast).
    ref_f32 = reference_forward_f32(x, params)
    assert jnp.allclose(out, ref_f32, atol=3e-2, rtol=3e-2)

    print("KERNEL_OK")
</pallas_src>

<mosaic_0001>
module attributes {stable_mosaic.version = 11 : i64} {
  func.func @mlp_kernel(%arg0: i32, %arg1: memref<32x11xbf16, #tpu.memory_space<vmem>>, %arg2: memref<11x128xbf16, #tpu.memory_space<vmem>>, %arg3: memref<1x128xf32, #tpu.memory_space<vmem>>, %arg4: memref<128x128xbf16, #tpu.memory_space<vmem>>, %arg5: memref<1x128xf32, #tpu.memory_space<vmem>>, %arg6: memref<128x128xbf16, #tpu.memory_space<vmem>>, %arg7: memref<1x128xf32, #tpu.memory_space<vmem>>, %arg8: memref<32x128xf32, #tpu.memory_space<vmem>>) attributes {dimension_semantics = [#tpu.dimension_semantics<parallel>], iteration_bounds = array<i64: 1>, scalar_prefetch = 0 : i64, scratch_operands = 0 : i64, tpu.core_type = #tpu.core_type<tc>, window_params = [{transform_indices = @transform_0, window_bounds = array<i64: 32, 11>}, {pipeline_mode = #tpu.pipeline_mode<synchronous>, transform_indices = @transform_1, window_bounds = array<i64: 11, 128>}, {pipeline_mode = #tpu.pipeline_mode<synchronous>, transform_indices = @transform_2, window_bounds = array<i64: 1, 128>}, {pipeline_mode = #tpu.pipeline_mode<synchronous>, transform_indices = @transform_3, window_bounds = array<i64: 128, 128>}, {pipeline_mode = #tpu.pipeline_mode<synchronous>, transform_indices = @transform_4, window_bounds = array<i64: 1, 128>}, {pipeline_mode = #tpu.pipeline_mode<synchronous>, transform_indices = @transform_5, window_bounds = array<i64: 128, 128>}, {pipeline_mode = #tpu.pipeline_mode<synchronous>, transform_indices = @transform_6, window_bounds = array<i64: 1, 128>}, {transform_indices = @transform_7, window_bounds = array<i64: 32, 128>}]} {
    %c0 = arith.constant 0 : index
    %c0_0 = arith.constant 0 : index
    %0 = vector.load %arg1[%c0, %c0_0] : memref<32x11xbf16, #tpu.memory_space<vmem>>, vector<32x11xbf16>
    %c0_1 = arith.constant 0 : index
    %c0_2 = arith.constant 0 : index
    %1 = vector.load %arg2[%c0_1, %c0_2] : memref<11x128xbf16, #tpu.memory_space<vmem>>, vector<11x128xbf16>
    %cst = arith.constant dense<0.000000e+00> : vector<32x128xf32>
    %2 = tpu.matmul %0, %1, %cst {dimension_numbers = #tpu.dot_dimension_numbers<[1], [0], [0], [1], [0, 0, 1, 1], [], []>} : vector<32x11xbf16>, vector<11x128xbf16>, vector<32x128xf32> -> vector<32x128xf32>
    %c0_3 = arith.constant 0 : index
    %c0_4 = arith.constant 0 : index
    %3 = vector.load %arg3[%c0_3, %c0_4] : memref<1x128xf32, #tpu.memory_space<vmem>>, vector<1x128xf32>
    %4 = vector.broadcast %3 : vector<1x128xf32> to vector<32x128xf32>
    %5 = arith.addf %2, %4 : vector<32x128xf32>
    %cst_5 = arith.constant 0.000000e+00 : f32
    %6 = vector.broadcast %cst_5 : f32 to vector<32x128xf32>
    %7 = arith.maximumf %5, %6 : vector<32x128xf32>
    %8 = arith.truncf %7 : vector<32x128xf32> to vector<32x128xbf16>
    %c0_6 = arith.constant 0 : index
    %c0_7 = arith.constant 0 : index
    %9 = vector.load %arg4[%c0_6, %c0_7] : memref<128x128xbf16, #tpu.memory_space<vmem>>, vector<128x128xbf16>
    %cst_8 = arith.constant dense<0.000000e+00> : vector<32x128xf32>
    %10 = tpu.matmul %8, %9, %cst_8 {dimension_numbers = #tpu.dot_dimension_numbers<[1], [0], [0], [1], [0, 0, 1, 1], [], []>} : vector<32x128xbf16>, vector<128x128xbf16>, vector<32x128xf32> -> vector<32x128xf32>
    %c0_9 = arith.constant 0 : index
    %c0_10 = arith.constant 0 : index
    %11 = vector.load %arg5[%c0_9, %c0_10] : memref<1x128xf32, #tpu.memory_space<vmem>>, vector<1x128xf32>
    %12 = vector.broadcast %11 : vector<1x128xf32> to vector<32x128xf32>
    %13 = arith.addf %10, %12 : vector<32x128xf32>
    %cst_11 = arith.constant 0.000000e+00 : f32
    %14 = vector.broadcast %cst_11 : f32 to vector<32x128xf32>
    %15 = arith.maximumf %13, %14 : vector<32x128xf32>
    %16 = arith.truncf %15 : vector<32x128xf32> to vector<32x128xbf16>
    %c0_12 = arith.constant 0 : index
    %c0_13 = arith.constant 0 : index
    %17 = vector.load %arg6[%c0_12, %c0_13] : memref<128x128xbf16, #tpu.memory_space<vmem>>, vector<128x128xbf16>
    %cst_14 = arith.constant dense<0.000000e+00> : vector<32x128xf32>
    %18 = tpu.matmul %16, %17, %cst_14 {dimension_numbers = #tpu.dot_dimension_numbers<[1], [0], [0], [1], [0, 0, 1, 1], [], []>} : vector<32x128xbf16>, vector<128x128xbf16>, vector<32x128xf32> -> vector<32x128xf32>
    %c0_15 = arith.constant 0 : index
    %c0_16 = arith.constant 0 : index
    %19 = vector.load %arg7[%c0_15, %c0_16] : memref<1x128xf32, #tpu.memory_space<vmem>>, vector<1x128xf32>
    %20 = vector.broadcast %19 : vector<1x128xf32> to vector<32x128xf32>
    %21 = arith.addf %18, %20 : vector<32x128xf32>
    %c0_17 = arith.constant 0 : index
    %c0_18 = arith.constant 0 : index
    %22 = vector.load %arg8[%c0_17, %c0_18] : memref<32x128xf32, #tpu.memory_space<vmem>>, vector<32x128xf32>
    tpu.vector_store %arg8[%c0_17, %c0_18], %21 {strides = array<i32>} : memref<32x128xf32, #tpu.memory_space<vmem>>, vector<32x128xf32>,
    return
  }
  func.func @transform_0(%arg0: i32) -> (i32, i32) {
    %c0_i32 = arith.constant 0 : i32
    %c0_i32_0 = arith.constant 0 : i32
    return %arg0, %c0_i32 : i32, i32
  }
  func.func @transform_1(%arg0: i32) -> (i32, i32) {
    %c0_i32 = arith.constant 0 : i32
    %c0_i32_0 = arith.constant 0 : i32
    %c0_i32_1 = arith.constant 0 : i32
    return %c0_i32, %c0_i32_0 : i32, i32
  }
  func.func @transform_2(%arg0: i32) -> (i32, i32) {
    %c0_i32 = arith.constant 0 : i32
    %c0_i32_0 = arith.constant 0 : i32
    %c0_i32_1 = arith.constant 0 : i32
    return %c0_i32, %c0_i32_0 : i32, i32
  }
  func.func @transform_3(%arg0: i32) -> (i32, i32) {
    %c0_i32 = arith.constant 0 : i32
    %c0_i32_0 = arith.constant 0 : i32
    %c0_i32_1 = arith.constant 0 : i32
    return %c0_i32, %c0_i32_0 : i32, i32
  }
  func.func @transform_4(%arg0: i32) -> (i32, i32) {
    %c0_i32 = arith.constant 0 : i32
    %c0_i32_0 = arith.constant 0 : i32
    %c0_i32_1 = arith.constant 0 : i32
    return %c0_i32, %c0_i32_0 : i32, i32
  }
  func.func @transform_5(%arg0: i32) -> (i32, i32) {
    %c0_i32 = arith.constant 0 : i32
    %c0_i32_0 = arith.constant 0 : i32
    %c0_i32_1 = arith.constant 0 : i32
    return %c0_i32, %c0_i32_0 : i32, i32
  }
  func.func @transform_6(%arg0: i32) -> (i32, i32) {
    %c0_i32 = arith.constant 0 : i32
    %c0_i32_0 = arith.constant 0 : i32
    %c0_i32_1 = arith.constant 0 : i32
    return %c0_i32, %c0_i32_0 : i32, i32
  }
  func.func @transform_7(%arg0: i32) -> (i32, i32) {
    %c0_i32 = arith.constant 0 : i32
    %c0_i32_0 = arith.constant 0 : i32
    return %arg0, %c0_i32 : i32, i32
  }
}

</mosaic_0001>

<llo_original>
// kernel: net_forward.1
$region0: #{net_forward.1}
  #allocation0 [shape = 'u32[]', space=smem, size = 0x4, offset = 0x4, fixed_abs, tag = 'smem constant byte address 0x4 - core index']
  #allocation1 [shape = 'u32[144,128]{1,0:T(1,128)}', space=vmem, size = 0x12000, scoped, tag = 'internal scratch']
  %s0 = inlined_call_operand.vmem [shape: bf16[32,11], index: 0, kind: input, shape index: {}]
  %s1 = inlined_call_operand.vmem [shape: bf16[11,128], index: 1, kind: input, shape index: {}]
  %s2 = inlined_call_operand.vmem [shape: f32[1,128], index: 2, kind: input, shape index: {}]
  %s3 = inlined_call_operand.vmem [shape: bf16[128,128], index: 3, kind: input, shape index: {}]
  %s4 = inlined_call_operand.vmem [shape: f32[1,128], index: 4, kind: input, shape index: {}]
  %s5 = inlined_call_operand.vmem [shape: bf16[128,128], index: 5, kind: input, shape index: {}]
  %s6 = inlined_call_operand.vmem [shape: f32[1,128], index: 6, kind: input, shape index: {}]
  %s7 = inlined_call_operand.vmem [shape: f32[32,128], index: 7, kind: output, shape index: {}]
  %s8 = sld [smem:[#allocation0]]
  $region38: #{net_forward.1} parent=0
    _
  %s10 = ssub.s32 1, %s8
  %s11 = scalar_select 0, %s10, %s8
  // Predicated region
  $region2: #{net_forward.1} parent=0 // pred_check
    _
  $region3: #{net_forward.1} parent=0 // pred_check_branch
    %13 = sbr.rel (0) target = $region5
  $region4: #{net_forward.1} parent=0 // pred_region
    _
  $region5: #{net_forward.1} parent=0 // pred_fallthru
    _
  // Predicated region
  $region6: #{net_forward.1} parent=0 // pred_check
    _
  $region7: #{net_forward.1} parent=0 // pred_check_branch
    %15 = sbr.rel (0) target = $region9
  $region8: #{net_forward.1} parent=0 // pred_region
    _
  $region9: #{net_forward.1} parent=0 // pred_fallthru
    _
  // Predicated region
  $region10: #{net_forward.1} parent=0 // pred_check
    _
  $region11: #{net_forward.1} parent=0 // pred_check_branch
    %17 = sbr.rel (0) target = $region13
  $region12: #{net_forward.1} parent=0 // pred_region
    _
  $region13: #{net_forward.1} parent=0 // pred_fallthru
    _
  // Predicated region
  $region14: #{net_forward.1} parent=0 // pred_check
    _
  $region15: #{net_forward.1} parent=0 // pred_check_branch
    %19 = sbr.rel (0) target = $region17
  $region16: #{net_forward.1} parent=0 // pred_region
    _
  $region17: #{net_forward.1} parent=0 // pred_fallthru
    _
  // Predicated region
  $region18: #{net_forward.1} parent=0 // pred_check
    _
  $region19: #{net_forward.1} parent=0 // pred_check_branch
    %21 = sbr.rel (0) target = $region21
  $region20: #{net_forward.1} parent=0 // pred_region
    _
  $region21: #{net_forward.1} parent=0 // pred_fallthru
    _
  // Predicated region
  $region22: #{net_forward.1} parent=0 // pred_check
    _
  $region23: #{net_forward.1} parent=0 // pred_check_branch
    %23 = sbr.rel (0) target = $region25
  $region24: #{net_forward.1} parent=0 // pred_region
    _
  $region25: #{net_forward.1} parent=0 // pred_fallthru
    _
  // Predicated region
  $region26: #{net_forward.1} parent=0 // pred_check
    _
  $region27: #{net_forward.1} parent=0 // pred_check_branch
    %25 = sbr.rel (0) target = $region29
  $region28: #{net_forward.1} parent=0 // pred_region
    _
  $region29: #{net_forward.1} parent=0 // pred_fallthru
    _
  %v27 = vld [vmem:[%s0] sm:$0xf]
  %v28 = vld [vmem:[%s0 + $0x4] sm:$0xf]
  %v29 = vld [vmem:[%s0 + $0x8] sm:$0xf]
  %v30 = vld [vmem:[%s0 + $0xc] sm:$0xf]
  %v31 = vld [vmem:[%s1] sm:$0xf]
  %v32 = vld [vmem:[%s1 + $0x4] sm:$0x3]
  %v33 = vld [vmem:[%s2] sm:$0x1]
  %v35 = vlaneseq
  %v36 = vshrl.u32 %v35, 7
  %v37 = vsub.s32 0, %v36
  %v38 = vrot.slane %v33, %v37
  %v44 = vunpack.c.l.b16 %v27
  %v45 = vunpack.c.l.b16 %v28
  %v46 = vunpack.c.l.b16 %v29
  %v47 = vunpack.c.l.b16 %v30
  %v48 = vpack.c.b16 %v45, %v44
  %v49 = vpack.c.b16 %v47, %v46
  %v52 = vunpack.c.l.b16 %v31
  %v53 = vunpack.c.l.b16 %v32
  %v54 = vpack.c.b16 %v53, %v52
  %vm55 = vcmask 89088
  %v57 = vsel %vm55, %v48, 0
  %v60 = vsel %vm55, %v49, 0
  %vm62 = vcmask 1044480
  %vm63 = vcmask 1045504
  %v64 = vsel %vm62, 4294967295, 65535
  %v65 = vsel %vm63, %v64, 0
  %v67 = vand.u32 %v54, %v65
  %69 = vmatprep.subr.bf16.mxu0 0
  %70 = vmatpush1.bf16.msra.mxu0 0
  %71 = vmatprep.subr.bf16.mxu0 0
  %72 = vmatpush1.bf16.msra.mxu0 0
  %73 = vmatprep.subr.bf16.mxu0 0
  %74 = vmatpush1.bf16.msra.mxu0 0
  %75 = vmatprep.subr.bf16.mxu0 0
  %76 = vmatpush1.bf16.msra.mxu0 0
  %77 = vmatprep.subr.bf16.mxu0 0
  %78 = vmatpush1.bf16.msra.mxu0 0
  %79 = vmatprep.subr.bf16.mxu0 0
  %80 = vmatpush1.bf16.msra.mxu0 0
  %81 = vmatprep.subr.bf16.mxu0 0
  %82 = vmatpush1.bf16.msra.mxu0 0
  %83 = vmatprep.subr.bf16.mxu0 0
  %84 = vmatpush1.bf16.msra.mxu0 %v67
  %85 = vmatprep.subr.bf16.mxu0 0
  %86 = vmatpush2.bf16.msra.mxu0 0
  %87 = vmatprep.subr.bf16.mxu0 0
  %88 = vmatpush2.bf16.msra.mxu0 0
  %89 = vmatprep.subr.bf16.mxu0 0
  %90 = vmatpush2.bf16.msra.mxu0 0
  %91 = vmatprep.subr.bf16.mxu0 0
  %92 = vmatpush2.bf16.msra.mxu0 0
  %93 = vmatprep.subr.bf16.mxu0 0
  %94 = vmatpush2.bf16.msra.mxu0 0
  %95 = vmatprep.subr.bf16.mxu0 0
  %96 = vmatpush2.bf16.msra.mxu0 0
  %97 = vmatprep.subr.bf16.mxu0 0
  %98 = vmatpush2.bf16.msra.mxu0 0
  %99 = vmatprep.subr.bf16.mxu0 0
  %100 = vmatpush2.bf16.msra.mxu0 0
  %101 = vmatprep.mubr.bf16.mxu0 0
  %102 = vmatmul.mubr.bf16.gmra.mxu0 %v57
  %v103 = vpop.f32.mrf.mxu0
  %v104 = vadd.f32 %v38, %v103
  %v105 = vpop.f32.mrf.mxu0
  %v106 = vpop.f32.mrf.mxu0
  %v107 = vadd.f32 %v38, %v106
  %v108 = vpop.f32.mrf.mxu0
  %109 = vmatprep.mubr.bf16.mxu0 0
  %110 = vmatmul.mubr.bf16.gmra.mxu0 %v60
  %v111 = vpop.f32.mrf.mxu0
  %v112 = vadd.f32 %v38, %v111
  %v113 = vpop.f32.mrf.mxu0
  %v114 = vpop.f32.mrf.mxu0
  %v115 = vadd.f32 %v38, %v114
  %v116 = vpop.f32.mrf.mxu0
  %117 = vdwg.mxu0
  %v118 = vmax.f32 %v104, 0.0
  %v119 = vmax.f32 %v107, 0.0
  %v120 = vmax.f32 %v112, 0.0
  %v121 = vmax.f32 %v115, 0.0
  %v122 = vpack.c.bf16 %v119, %v118
  %v123 = vpack.c.bf16 %v121, %v120
  %v124 = vld [vmem:[%s3] sm:$0xf]
  %v125 = vld [vmem:[%s3 + $0x4] sm:$0xf]
  %v126 = vld [vmem:[%s3 + $0x8] sm:$0xf]
  %v127 = vld [vmem:[%s3 + $0xc] sm:$0xf]
  %v128 = vld [vmem:[%s3 + $0x10] sm:$0xf]
  %v129 = vld [vmem:[%s3 + $0x14] sm:$0xf]
  %v130 = vld [vmem:[%s3 + $0x18] sm:$0xf]
  %v131 = vld [vmem:[%s3 + $0x1c] sm:$0xf]
  %v132 = vld [vmem:[%s3 + $0x20] sm:$0xf]
  %v133 = vld [vmem:[%s3 + $0x24] sm:$0xf]
  %v134 = vld [vmem:[%s3 + $0x28] sm:$0xf]
  %v135 = vld [vmem:[%s3 + $0x2c] sm:$0xf]
  %v136 = vld [vmem:[%s3 + $0x30] sm:$0xf]
  %v137 = vld [vmem:[%s3 + $0x34] sm:$0xf]
  %v138 = vld [vmem:[%s3 + $0x38] sm:$0xf]
  %v139 = vld [vmem:[%s3 + $0x3c] sm:$0xf]
  %v140 = vld [vmem:[%s4] sm:$0x1]
  %v142 = vlaneseq
  %v143 = vshrl.u32 %v142, 7
  %v144 = vsub.s32 0, %v143
  %v145 = vrot.slane %v140, %v144
  %v163 = vunpack.c.l.b16 %v124
  %v164 = vunpack.c.l.b16 %v125
  %v165 = vunpack.c.l.b16 %v126
  %v166 = vunpack.c.l.b16 %v127
  %v167 = vunpack.c.l.b16 %v128
  %v168 = vunpack.c.l.b16 %v129
  %v169 = vunpack.c.l.b16 %v130
  %v170 = vunpack.c.l.b16 %v131
  %v171 = vunpack.c.l.b16 %v132
  %v172 = vunpack.c.l.b16 %v133
  %v173 = vunpack.c.l.b16 %v134
  %v174 = vunpack.c.l.b16 %v135
  %v175 = vunpack.c.l.b16 %v136
  %v176 = vunpack.c.l.b16 %v137
  %v177 = vunpack.c.l.b16 %v138
  %v178 = vunpack.c.l.b16 %v139
  %v179 = vpack.c.b16 %v164, %v163
  %v180 = vpack.c.b16 %v166, %v165
  %v181 = vpack.c.b16 %v168, %v167
  %v182 = vpack.c.b16 %v170, %v169
  %v183 = vpack.c.b16 %v172, %v171
  %v184 = vpack.c.b16 %v174, %v173
  %v185 = vpack.c.b16 %v176, %v175
  %v186 = vpack.c.b16 %v178, %v177
  %195 = vmatprep.subr.bf16.mxu0 0
  %196 = vmatpush1.bf16.msra.mxu0 %v186
  %197 = vmatprep.subr.bf16.mxu0 0
  %198 = vmatpush1.bf16.msra.mxu0 %v185
  %199 = vmatprep.subr.bf16.mxu0 0
  %200 = vmatpush1.bf16.msra.mxu0 %v184
  %201 = vmatprep.subr.bf16.mxu0 0
  %202 = vmatpush1.bf16.msra.mxu0 %v183
  %203 = vmatprep.subr.bf16.mxu0 0
  %204 = vmatpush1.bf16.msra.mxu0 %v182
  %205 = vmatprep.subr.bf16.mxu0 0
  %206 = vmatpush1.bf16.msra.mxu0 %v181
  %207 = vmatprep.subr.bf16.mxu0 0
  %208 = vmatpush1.bf16.msra.mxu0 %v180
  %209 = vmatprep.subr.bf16.mxu0 0
  %210 = vmatpush1.bf16.msra.mxu0 %v179
  %211 = vmatprep.subr.bf16.mxu0 0
  %212 = vmatpush2.bf16.msra.mxu0 0
  %213 = vmatprep.subr.bf16.mxu0 0
  %214 = vmatpush2.bf16.msra.mxu0 0
  %215 = vmatprep.subr.bf16.mxu0 0
  %216 = vmatpush2.bf16.msra.mxu0 0
  %217 = vmatprep.subr.bf16.mxu0 0
  %218 = vmatpush2.bf16.msra.mxu0 0
  %219 = vmatprep.subr.bf16.mxu0 0
  %220 = vmatpush2.bf16.msra.mxu0 0
  %221 = vmatprep.subr.bf16.mxu0 0
  %222 = vmatpush2.bf16.msra.mxu0 0
  %223 = vmatprep.subr.bf16.mxu0 0
  %224 = vmatpush2.bf16.msra.mxu0 0
  %225 = vmatprep.subr.bf16.mxu0 0
  %226 = vmatpush2.bf16.msra.mxu0 0
  %227 = vmatprep.mubr.bf16.mxu0 0
  %228 = vmatmul.mubr.bf16.gmra.mxu0 %v122
  %v229 = vpop.f32.mrf.mxu0
  %v230 = vadd.f32 %v145, %v229
  %v231 = vpop.f32.mrf.mxu0
  %v232 = vpop.f32.mrf.mxu0
  %v233 = vadd.f32 %v145, %v232
  %v234 = vpop.f32.mrf.mxu0
  %235 = vmatprep.mubr.bf16.mxu0 0
  %236 = vmatmul.mubr.bf16.gmra.mxu0 %v123
  %v237 = vpop.f32.mrf.mxu0
  %v238 = vadd.f32 %v145, %v237
  %v239 = vpop.f32.mrf.mxu0
  %v240 = vpop.f32.mrf.mxu0
  %v241 = vadd.f32 %v145, %v240
  %v242 = vpop.f32.mrf.mxu0
  %243 = vdwg.mxu0
  %v244 = vmax.f32 %v230, 0.0
  %v245 = vmax.f32 %v233, 0.0
  %v246 = vmax.f32 %v238, 0.0
  %v247 = vmax.f32 %v241, 0.0
  %v248 = vpack.c.bf16 %v245, %v244
  %v249 = vpack.c.bf16 %v247, %v246
  %v250 = vld [vmem:[%s5] sm:$0xf]
  %v251 = vld [vmem:[%s5 + $0x4] sm:$0xf]
  %v252 = vld [vmem:[%s5 + $0x8] sm:$0xf]
  %v253 = vld [vmem:[%s5 + $0xc] sm:$0xf]
  %v254 = vld [vmem:[%s5 + $0x10] sm:$0xf]
  %v255 = vld [vmem:[%s5 + $0x14] sm:$0xf]
  %v256 = vld [vmem:[%s5 + $0x18] sm:$0xf]
  %v257 = vld [vmem:[%s5 + $0x1c] sm:$0xf]
  %v258 = vld [vmem:[%s5 + $0x20] sm:$0xf]
  %v259 = vld [vmem:[%s5 + $0x24] sm:$0xf]
  %v260 = vld [vmem:[%s5 + $0x28] sm:$0xf]
  %v261 = vld [vmem:[%s5 + $0x2c] sm:$0xf]
  %v262 = vld [vmem:[%s5 + $0x30] sm:$0xf]
  %v263 = vld [vmem:[%s5 + $0x34] sm:$0xf]
  %v264 = vld [vmem:[%s5 + $0x38] sm:$0xf]
  %v265 = vld [vmem:[%s5 + $0x3c] sm:$0xf]
  %v266 = vld [vmem:[%s6] sm:$0x1]
  %v268 = vlaneseq
  %v269 = vshrl.u32 %v268, 7
  %v270 = vsub.s32 0, %v269
  %v271 = vrot.slane %v266, %v270
  %v289 = vunpack.c.l.b16 %v250
  %v290 = vunpack.c.l.b16 %v251
  %v291 = vunpack.c.l.b16 %v252
  %v292 = vunpack.c.l.b16 %v253
  %v293 = vunpack.c.l.b16 %v254
  %v294 = vunpack.c.l.b16 %v255
  %v295 = vunpack.c.l.b16 %v256
  %v296 = vunpack.c.l.b16 %v257
  %v297 = vunpack.c.l.b16 %v258
  %v298 = vunpack.c.l.b16 %v259
  %v299 = vunpack.c.l.b16 %v260
  %v300 = vunpack.c.l.b16 %v261
  %v301 = vunpack.c.l.b16 %v262
  %v302 = vunpack.c.l.b16 %v263
  %v303 = vunpack.c.l.b16 %v264
  %v304 = vunpack.c.l.b16 %v265
  %v305 = vpack.c.b16 %v290, %v289
  %v306 = vpack.c.b16 %v292, %v291
  %v307 = vpack.c.b16 %v294, %v293
  %v308 = vpack.c.b16 %v296, %v295
  %v309 = vpack.c.b16 %v298, %v297
  %v310 = vpack.c.b16 %v300, %v299
  %v311 = vpack.c.b16 %v302, %v301
  %v312 = vpack.c.b16 %v304, %v303
  %321 = vmatprep.subr.bf16.mxu0 0
  %322 = vmatpush1.bf16.msra.mxu0 %v312
  %323 = vmatprep.subr.bf16.mxu0 0
  %324 = vmatpush1.bf16.msra.mxu0 %v311
  %325 = vmatprep.subr.bf16.mxu0 0
  %326 = vmatpush1.bf16.msra.mxu0 %v310
  %327 = vmatprep.subr.bf16.mxu0 0
  %328 = vmatpush1.bf16.msra.mxu0 %v309
  %329 = vmatprep.subr.bf16.mxu0 0
  %330 = vmatpush1.bf16.msra.mxu0 %v308
  %331 = vmatprep.subr.bf16.mxu0 0
  %332 = vmatpush1.bf16.msra.mxu0 %v307
  %333 = vmatprep.subr.bf16.mxu0 0
  %334 = vmatpush1.bf16.msra.mxu0 %v306
  %335 = vmatprep.subr.bf16.mxu0 0
  %336 = vmatpush1.bf16.msra.mxu0 %v305
  %337 = vmatprep.subr.bf16.mxu0 0
  %338 = vmatpush2.bf16.msra.mxu0 0
  %339 = vmatprep.subr.bf16.mxu0 0
  %340 = vmatpush2.bf16.msra.mxu0 0
  %341 = vmatprep.subr.bf16.mxu0 0
  %342 = vmatpush2.bf16.msra.mxu0 0
  %343 = vmatprep.subr.bf16.mxu0 0
  %344 = vmatpush2.bf16.msra.mxu0 0
  %345 = vmatprep.subr.bf16.mxu0 0
  %346 = vmatpush2.bf16.msra.mxu0 0
  %347 = vmatprep.subr.bf16.mxu0 0
  %348 = vmatpush2.bf16.msra.mxu0 0
  %349 = vmatprep.subr.bf16.mxu0 0
  %350 = vmatpush2.bf16.msra.mxu0 0
  %351 = vmatprep.subr.bf16.mxu0 0
  %352 = vmatpush2.bf16.msra.mxu0 0
  %353 = vmatprep.mubr.bf16.mxu0 0
  %354 = vmatmul.mubr.bf16.gmra.mxu0 %v248
  %v355 = vpop.f32.mrf.mxu0
  %v356 = vadd.f32 %v271, %v355
  %v357 = vpop.f32.mrf.mxu0
  %v358 = vpop.f32.mrf.mxu0
  %v359 = vadd.f32 %v271, %v358
  %v360 = vpop.f32.mrf.mxu0
  %361 = vmatprep.mubr.bf16.mxu0 0
  %362 = vmatmul.mubr.bf16.gmra.mxu0 %v249
  %v363 = vpop.f32.mrf.mxu0
  %v364 = vadd.f32 %v271, %v363
  %v365 = vpop.f32.mrf.mxu0
  %v366 = vpop.f32.mrf.mxu0
  %v367 = vadd.f32 %v271, %v366
  %v368 = vpop.f32.mrf.mxu0
  %369 = vdwg.mxu0
  %370 = vst [vmem:[%s7] sm:$0xff] %v356
  %371 = vst [vmem:[%s7 + $0x8] sm:$0xff] %v359
  %372 = vst [vmem:[%s7 + $0x10] sm:$0xff] %v364
  %373 = vst [vmem:[%s7 + $0x18] sm:$0xff] %v367
  // Predicated region
  $region30: #{net_forward.1} parent=0 // pred_check
    _
  $region31: #{net_forward.1} parent=0 // pred_check_branch
    %375 = sbr.rel (0) target = $region33
  $region32: #{net_forward.1} parent=0 // pred_region
    _
  $region33: #{net_forward.1} parent=0 // pred_fallthru
    _
  // Predicated region
  $region34: #{net_forward.1} parent=0 // pred_check
    _
  $region35: #{net_forward.1} parent=0 // pred_check_branch
    %377 = sbr.rel (0) target = $region37
  $region36: #{net_forward.1} parent=0 // pred_region
    _
  $region37: #{net_forward.1} parent=0 // pred_fallthru
    _

</llo_original>
